<compile_context>
chip_gen: v7x
topology: tpu7x:2x2x1
jax: 0.10.0
libtpu: 0.0.40
codegen_flags: <defaults>
</compile_context>

<pallas_src>
import functools

import jax
import jax.numpy as jnp
from jax.experimental import pallas as pl
from jax.experimental.pallas import tpu as pltpu


def _embed_relu_vpu(x, w, b):
    """relu(x @ w + b) for a tiny contraction dim K via VPU broadcast-FMA.

    x: [rows, K] (K small, e.g. 2 or 3), w: [K, H] f32, b: [1, H] f32.
    Avoids a <3%-utilized padded MXU pass for K=2/3 contractions.
    """
    rows = x.shape[0]
    h = w.shape[1]
    acc = jnp.broadcast_to(b, (rows, h)).astype(jnp.float32)
    for k in range(x.shape[1]):  # static, tiny
        acc = acc + x[:, k:k + 1].astype(jnp.float32) * w[k:k + 1, :]
    return jnp.maximum(acc, 0.0)


def _gnn_kernel(item_ref, pat_ref, adj_ref, adj_t_ref,
                w_ie_ref, b_ie_ref,
                w_pe_ref, b_pe_ref,
                w_i2p_ref, b_i2p_ref,
                w_p2i_ref, b_p2i_ref,
                h_item_out, h_pat_out,
                *, rounds, reassoc_item, reassoc_pattern, use_bf16):
    f32 = jnp.float32
    mx = jnp.bfloat16 if use_bf16 else jnp.float32

    # Initial embeddings: relu(x @ W + b)  (VPU path, K is 2 / 3).
    h_item = _embed_relu_vpu(item_ref[...], w_ie_ref[...], b_ie_ref[...])
    h_pat = _embed_relu_vpu(pat_ref[...], w_pe_ref[...], b_pe_ref[...])

    # Hoist all loop-invariant VMEM reads out of the unrolled rounds loop.
    adj = adj_ref[...]        # [m, n], mx dtype (counts, exact in bf16)
    adj_t = adj_t_ref[...]    # [n, m], mx dtype (pre-built; no in-kernel .T)
    w_i2p = w_i2p_ref[...]    # [H, H], mx dtype
    b_i2p = b_i2p_ref[...]    # [1, H], f32
    w_p2i = w_p2i_ref[...]    # [H, H], mx dtype
    b_p2i = b_p2i_ref[...]    # [1, H], f32

    # Message passing (statically unrolled; rounds is small).
    for _ in range(rounds):
        # pattern messages: index_add_(p_idx, h_item[i_idx]) == adj @ h_item
        hi = h_item.astype(mx)
        if reassoc_pattern:  # n < m: dense HxH matmul over n rows instead of m
            p_msg = jnp.dot(adj,
                            jnp.dot(hi, w_i2p, preferred_element_type=f32).astype(mx),
                            preferred_element_type=f32)
        else:
            p_msg = jnp.dot(jnp.dot(adj, hi, preferred_element_type=f32).astype(mx),
                            w_i2p, preferred_element_type=f32)
        p_msg = jnp.maximum(p_msg + b_i2p, 0.0)
        h_pat = jnp.maximum(h_pat + p_msg, 0.0)

        # item messages: index_add_(i_idx, h_pat[p_idx]) == adj_t @ h_pat
        hp = h_pat.astype(mx)
        if reassoc_item:     # m < n: dense HxH matmul over m rows instead of n
            i_msg = jnp.dot(adj_t,
                            jnp.dot(hp, w_p2i, preferred_element_type=f32).astype(mx),
                            preferred_element_type=f32)
        else:
            i_msg = jnp.dot(jnp.dot(adj_t, hp, preferred_element_type=f32).astype(mx),
                            w_p2i, preferred_element_type=f32)
        i_msg = jnp.maximum(i_msg + b_p2i, 0.0)
        h_item = jnp.maximum(h_item + i_msg, 0.0)

    h_item_out[...] = h_item
    h_pat_out[...] = h_pat


def branching_gnn_forward(item_feat, pattern_feat, edges, params,
                          hidden_dim=32, message_passing_rounds=2,
                          use_bf16=True):
    """item_feat: [n, item_feat_dim], pattern_feat: [m, pattern_feat_dim],
    edges: list of (item_idx, pattern_idx)."""
    n = item_feat.shape[0]
    m = pattern_feat.shape[0]
    mx_dtype = jnp.bfloat16 if use_bf16 else jnp.float32

    # Edge list -> dense adjacencies, built directly in both orientations so
    # no transpose is needed anywhere (counts duplicates, like index_add_).
    if len(edges) > 0:
        i_idx = jnp.array([e[0] for e in edges], dtype=jnp.int32)
        p_idx = jnp.array([e[1] for e in edges], dtype=jnp.int32)
        adj = jnp.zeros((m, n), jnp.float32).at[p_idx, i_idx].add(1.0)
        adj_t = jnp.zeros((n, m), jnp.float32).at[i_idx, p_idx].add(1.0)
        rounds = message_passing_rounds
    else:
        # PyTorch skips message passing entirely when there are no edges.
        adj = jnp.zeros((m, n), jnp.float32)
        adj_t = jnp.zeros((n, m), jnp.float32)
        rounds = 0
    adj = adj.astype(mx_dtype)
    adj_t = adj_t.astype(mx_dtype)

    # PyTorch Linear does y = x @ W.T + b; pre-transpose weights to [in, out].
    # Embedding weights stay f32 (used on the VPU path); message-passing
    # weights use the MXU dtype.
    w_ie = params["item_embed_w"].T.astype(jnp.float32)
    b_ie = params["item_embed_b"][None, :].astype(jnp.float32)
    w_pe = params["pattern_embed_w"].T.astype(jnp.float32)
    b_pe = params["pattern_embed_b"][None, :].astype(jnp.float32)
    w_i2p = params["item_to_pattern_w"].T.astype(mx_dtype)
    b_i2p = params["item_to_pattern_b"][None, :].astype(jnp.float32)
    w_p2i = params["pattern_to_item_w"].T.astype(mx_dtype)
    b_p2i = params["pattern_to_item_b"][None, :].astype(jnp.float32)

    inputs = (item_feat.astype(jnp.float32), pattern_feat.astype(jnp.float32),
              adj, adj_t, w_ie, b_ie, w_pe, b_pe, w_i2p, b_i2p, w_p2i, b_p2i)

    # Explicit VMEM budget from actual buffer sizes (default scoped limit is
    # well below physical); capped at 64 MiB so it is valid on v7x too.
    in_bytes = sum(int(a.size) * a.dtype.itemsize for a in inputs)
    out_bytes = (n + m) * hidden_dim * 4
    vmem_limit = int(min(max(4 * (in_bytes + out_bytes), 2 << 20), 64 << 20))

    vmem = pl.BlockSpec(memory_space=pltpu.MemorySpace.VMEM)
    kernel = functools.partial(
        _gnn_kernel,
        rounds=rounds,
        reassoc_item=(m < n),
        reassoc_pattern=(n < m),
        use_bf16=use_bf16,
    )

    h_item, h_pat = pl.pallas_call(
        kernel,
        out_shape=(
            jax.ShapeDtypeStruct((n, hidden_dim), jnp.float32),
            jax.ShapeDtypeStruct((m, hidden_dim), jnp.float32),
        ),
        in_specs=[vmem] * len(inputs),
        out_specs=(vmem, vmem),
        compiler_params=pltpu.CompilerParams(vmem_limit_bytes=vmem_limit),
    )(*inputs)
    return h_item, h_pat


def _reference_forward(item_feat, pattern_feat, adj, params, rounds):
    """Pure-JAX f32 reference with the original (PyTorch) op ordering."""
    relu = lambda x: jnp.maximum(x, 0.0)
    h_item = relu(item_feat @ params["item_embed_w"].T + params["item_embed_b"])
    h_pat = relu(pattern_feat @ params["pattern_embed_w"].T + params["pattern_embed_b"])
    for _ in range(rounds):
        p_msg = relu(adj @ h_item @ params["item_to_pattern_w"].T
                     + params["item_to_pattern_b"])
        h_pat = relu(h_pat + p_msg)
        i_msg = relu(adj.T @ h_pat @ params["pattern_to_item_w"].T
                     + params["pattern_to_item_b"])
        h_item = relu(h_item + i_msg)
    return h_item, h_pat


def init_params(key, item_feat_dim, pattern_feat_dim, hidden_dim):
    ks = jax.random.split(key, 8)

    def lin(kw, kb, fan_in, fan_out):
        bound = 1.0 / jnp.sqrt(fan_in)
        w = jax.random.uniform(kw, (fan_out, fan_in), jnp.float32, -bound, bound)
        b = jax.random.uniform(kb, (fan_out,), jnp.float32, -bound, bound)
        return w, b

    p = {}
    p["item_embed_w"], p["item_embed_b"] = lin(ks[0], ks[1], item_feat_dim, hidden_dim)
    p["pattern_embed_w"], p["pattern_embed_b"] = lin(ks[2], ks[3], pattern_feat_dim, hidden_dim)
    p["item_to_pattern_w"], p["item_to_pattern_b"] = lin(ks[4], ks[5], hidden_dim, hidden_dim)
    p["pattern_to_item_w"], p["pattern_to_item_b"] = lin(ks[6], ks[7], hidden_dim, hidden_dim)
    # TODO(synk): pair_scorer weights omitted — unused in BranchingGNN.forward.
    return p


if __name__ == "__main__":
    item_feat_dim, pattern_feat_dim, hidden_dim, rounds = 2, 3, 32, 2
    n, m = 16, 8

    key = jax.random.PRNGKey(0)
    k_params, k_item, k_pat = jax.random.split(key, 3)

    params = init_params(k_params, item_feat_dim, pattern_feat_dim, hidden_dim)
    item_feat = jax.random.normal(k_item, (n, item_feat_dim), jnp.float32)
    pattern_feat = jax.random.normal(k_pat, (m, pattern_feat_dim), jnp.float32)

    # Deterministic bipartite edge list (item_idx, pattern_idx).
    edges = [(i, i % m) for i in range(n)] + [(i, (i + 3) % m) for i in range(n)]

    # Pure-JAX reference (PyTorch semantics, f32).
    i_idx = jnp.array([e[0] for e in edges], dtype=jnp.int32)
    p_idx = jnp.array([e[1] for e in edges], dtype=jnp.int32)
    adj = jnp.zeros((m, n), jnp.float32).at[p_idx, i_idx].add(1.0)
    ref_item, ref_pat = _reference_forward(item_feat, pattern_feat, adj, params, rounds)

    # Exact-precision path (f32 MXU operands): tight tolerance.
    h_item_f32, h_pat_f32 = branching_gnn_forward(
        item_feat, pattern_feat, edges, params,
        hidden_dim=hidden_dim, message_passing_rounds=rounds, use_bf16=False)
    jax.block_until_ready((h_item_f32, h_pat_f32))
    assert jnp.allclose(h_item_f32, ref_item, atol=1e-4, rtol=1e-4)
    assert jnp.allclose(h_pat_f32, ref_pat, atol=1e-4, rtol=1e-4)

    # Fast path (bf16 MXU operands, f32 accumulation): bf16-appropriate tolerance.
    h_item_bf16, h_pat_bf16 = branching_gnn_forward(
        item_feat, pattern_feat, edges, params,
        hidden_dim=hidden_dim, message_passing_rounds=rounds, use_bf16=True)
    jax.block_until_ready((h_item_bf16, h_pat_bf16))
    assert jnp.allclose(h_item_bf16, ref_item, atol=3e-2, rtol=3e-2)
    assert jnp.allclose(h_pat_bf16, ref_pat, atol=3e-2, rtol=3e-2)

    print("KERNEL_OK")
</pallas_src>

<mosaic_0001>
module attributes {stable_mosaic.version = 11 : i64} {
  func.func @_gnn_kernel(%arg0: memref<16x2xf32, #tpu.memory_space<vmem>>, %arg1: memref<8x3xf32, #tpu.memory_space<vmem>>, %arg2: memref<8x16xf32, #tpu.memory_space<vmem>>, %arg3: memref<16x8xf32, #tpu.memory_space<vmem>>, %arg4: memref<2x32xf32, #tpu.memory_space<vmem>>, %arg5: memref<1x32xf32, #tpu.memory_space<vmem>>, %arg6: memref<3x32xf32, #tpu.memory_space<vmem>>, %arg7: memref<1x32xf32, #tpu.memory_space<vmem>>, %arg8: memref<32x32xf32, #tpu.memory_space<vmem>>, %arg9: memref<1x32xf32, #tpu.memory_space<vmem>>, %arg10: memref<32x32xf32, #tpu.memory_space<vmem>>, %arg11: memref<1x32xf32, #tpu.memory_space<vmem>>, %arg12: memref<16x32xf32, #tpu.memory_space<vmem>>, %arg13: memref<8x32xf32, #tpu.memory_space<vmem>>) attributes {dimension_semantics = [], scalar_prefetch = 0 : i64, scratch_operands = 0 : i64, tpu.core_type = #tpu.core_type<tc>} {
    %c0 = arith.constant 0 : index
    %c0_0 = arith.constant 0 : index
    %0 = vector.load %arg0[%c0, %c0_0] : memref<16x2xf32, #tpu.memory_space<vmem>>, vector<16x2xf32>
    %c0_1 = arith.constant 0 : index
    %c0_2 = arith.constant 0 : index
    %1 = vector.load %arg4[%c0_1, %c0_2] : memref<2x32xf32, #tpu.memory_space<vmem>>, vector<2x32xf32>
    %c0_3 = arith.constant 0 : index
    %c0_4 = arith.constant 0 : index
    %2 = vector.load %arg5[%c0_3, %c0_4] : memref<1x32xf32, #tpu.memory_space<vmem>>, vector<1x32xf32>
    %3 = vector.shape_cast %2 : vector<1x32xf32> to vector<1x32xf32>
    %4 = vector.broadcast %3 : vector<1x32xf32> to vector<16x32xf32>
    %5 = vector.extract_strided_slice %0 {offsets = [0, 0], sizes = [16, 1], strides = [1, 1]} : vector<16x2xf32> to vector<16x1xf32>
    %6 = vector.extract_strided_slice %1 {offsets = [0, 0], sizes = [1, 32], strides = [1, 1]} : vector<2x32xf32> to vector<1x32xf32>
    %7 = vector.broadcast %5 : vector<16x1xf32> to vector<16x32xf32>
    %8 = vector.broadcast %6 : vector<1x32xf32> to vector<16x32xf32>
    %9 = arith.mulf %7, %8 : vector<16x32xf32>
    %10 = arith.addf %4, %9 : vector<16x32xf32>
    %11 = vector.extract_strided_slice %0 {offsets = [0, 1], sizes = [16, 1], strides = [1, 1]} : vector<16x2xf32> to vector<16x1xf32>
    %12 = vector.extract_strided_slice %1 {offsets = [1, 0], sizes = [1, 32], strides = [1, 1]} : vector<2x32xf32> to vector<1x32xf32>
    %13 = vector.broadcast %11 : vector<16x1xf32> to vector<16x32xf32>
    %14 = vector.broadcast %12 : vector<1x32xf32> to vector<16x32xf32>
    %15 = arith.mulf %13, %14 : vector<16x32xf32>
    %16 = arith.addf %10, %15 : vector<16x32xf32>
    %cst = arith.constant 0.000000e+00 : f32
    %17 = vector.broadcast %cst : f32 to vector<16x32xf32>
    %18 = arith.maximumf %16, %17 : vector<16x32xf32>
    %c0_5 = arith.constant 0 : index
    %c0_6 = arith.constant 0 : index
    %19 = vector.load %arg1[%c0_5, %c0_6] : memref<8x3xf32, #tpu.memory_space<vmem>>, vector<8x3xf32>
    %c0_7 = arith.constant 0 : index
    %c0_8 = arith.constant 0 : index
    %20 = vector.load %arg6[%c0_7, %c0_8] : memref<3x32xf32, #tpu.memory_space<vmem>>, vector<3x32xf32>
    %c0_9 = arith.constant 0 : index
    %c0_10 = arith.constant 0 : index
    %21 = vector.load %arg7[%c0_9, %c0_10] : memref<1x32xf32, #tpu.memory_space<vmem>>, vector<1x32xf32>
    %22 = vector.shape_cast %21 : vector<1x32xf32> to vector<1x32xf32>
    %23 = vector.broadcast %22 : vector<1x32xf32> to vector<8x32xf32>
    %24 = vector.extract_strided_slice %19 {offsets = [0, 0], sizes = [8, 1], strides = [1, 1]} : vector<8x3xf32> to vector<8x1xf32>
    %25 = vector.extract_strided_slice %20 {offsets = [0, 0], sizes = [1, 32], strides = [1, 1]} : vector<3x32xf32> to vector<1x32xf32>
    %26 = vector.broadcast %24 : vector<8x1xf32> to vector<8x32xf32>
    %27 = vector.broadcast %25 : vector<1x32xf32> to vector<8x32xf32>
    %28 = arith.mulf %26, %27 : vector<8x32xf32>
    %29 = arith.addf %23, %28 : vector<8x32xf32>
    %30 = vector.extract_strided_slice %19 {offsets = [0, 1], sizes = [8, 1], strides = [1, 1]} : vector<8x3xf32> to vector<8x1xf32>
    %31 = vector.extract_strided_slice %20 {offsets = [1, 0], sizes = [1, 32], strides = [1, 1]} : vector<3x32xf32> to vector<1x32xf32>
    %32 = vector.broadcast %30 : vector<8x1xf32> to vector<8x32xf32>
    %33 = vector.broadcast %31 : vector<1x32xf32> to vector<8x32xf32>
    %34 = arith.mulf %32, %33 : vector<8x32xf32>
    %35 = arith.addf %29, %34 : vector<8x32xf32>
    %36 = vector.extract_strided_slice %19 {offsets = [0, 2], sizes = [8, 1], strides = [1, 1]} : vector<8x3xf32> to vector<8x1xf32>
    %37 = vector.extract_strided_slice %20 {offsets = [2, 0], sizes = [1, 32], strides = [1, 1]} : vector<3x32xf32> to vector<1x32xf32>
    %38 = vector.broadcast %36 : vector<8x1xf32> to vector<8x32xf32>
    %39 = vector.broadcast %37 : vector<1x32xf32> to vector<8x32xf32>
    %40 = arith.mulf %38, %39 : vector<8x32xf32>
    %41 = arith.addf %35, %40 : vector<8x32xf32>
    %cst_11 = arith.constant 0.000000e+00 : f32
    %42 = vector.broadcast %cst_11 : f32 to vector<8x32xf32>
    %43 = arith.maximumf %41, %42 : vector<8x32xf32>
    %c0_12 = arith.constant 0 : index
    %c0_13 = arith.constant 0 : index
    %44 = vector.load %arg2[%c0_12, %c0_13] : memref<8x16xf32, #tpu.memory_space<vmem>>, vector<8x16xf32>
    %c0_14 = arith.constant 0 : index
    %c0_15 = arith.constant 0 : index
    %45 = vector.load %arg3[%c0_14, %c0_15] : memref<16x8xf32, #tpu.memory_space<vmem>>, vector<16x8xf32>
    %c0_16 = arith.constant 0 : index
    %c0_17 = arith.constant 0 : index
    %46 = vector.load %arg8[%c0_16, %c0_17] : memref<32x32xf32, #tpu.memory_space<vmem>>, vector<32x32xf32>
    %c0_18 = arith.constant 0 : index
    %c0_19 = arith.constant 0 : index
    %47 = vector.load %arg9[%c0_18, %c0_19] : memref<1x32xf32, #tpu.memory_space<vmem>>, vector<1x32xf32>
    %c0_20 = arith.constant 0 : index
    %c0_21 = arith.constant 0 : index
    %48 = vector.load %arg10[%c0_20, %c0_21] : memref<32x32xf32, #tpu.memory_space<vmem>>, vector<32x32xf32>
    %c0_22 = arith.constant 0 : index
    %c0_23 = arith.constant 0 : index
    %49 = vector.load %arg11[%c0_22, %c0_23] : memref<1x32xf32, #tpu.memory_space<vmem>>, vector<1x32xf32>
    %cst_24 = arith.constant dense<0.000000e+00> : vector<8x32xf32>
    %50 = tpu.matmul %44, %18, %cst_24 {dimension_numbers = #tpu.dot_dimension_numbers<[1], [0], [0], [1], [0, 0, 1, 1], [], []>} : vector<8x16xf32>, vector<16x32xf32>, vector<8x32xf32> -> vector<8x32xf32>
    %cst_25 = arith.constant dense<0.000000e+00> : vector<8x32xf32>
    %51 = tpu.matmul %50, %46, %cst_25 {dimension_numbers = #tpu.dot_dimension_numbers<[1], [0], [0], [1], [0, 0, 1, 1], [], []>} : vector<8x32xf32>, vector<32x32xf32>, vector<8x32xf32> -> vector<8x32xf32>
    %52 = vector.broadcast %47 : vector<1x32xf32> to vector<8x32xf32>
    %53 = arith.addf %51, %52 : vector<8x32xf32>
    %cst_26 = arith.constant 0.000000e+00 : f32
    %54 = vector.broadcast %cst_26 : f32 to vector<8x32xf32>
    %55 = arith.maximumf %53, %54 : vector<8x32xf32>
    %56 = arith.addf %43, %55 : vector<8x32xf32>
    %cst_27 = arith.constant 0.000000e+00 : f32
    %57 = vector.broadcast %cst_27 : f32 to vector<8x32xf32>
    %58 = arith.maximumf %56, %57 : vector<8x32xf32>
    %cst_28 = arith.constant dense<0.000000e+00> : vector<8x32xf32>
    %59 = tpu.matmul %58, %48, %cst_28 {dimension_numbers = #tpu.dot_dimension_numbers<[1], [0], [0], [1], [0, 0, 1, 1], [], []>} : vector<8x32xf32>, vector<32x32xf32>, vector<8x32xf32> -> vector<8x32xf32>
    %cst_29 = arith.constant dense<0.000000e+00> : vector<16x32xf32>
    %60 = tpu.matmul %45, %59, %cst_29 {dimension_numbers = #tpu.dot_dimension_numbers<[1], [0], [0], [1], [0, 0, 1, 1], [], []>} : vector<16x8xf32>, vector<8x32xf32>, vector<16x32xf32> -> vector<16x32xf32>
    %61 = vector.broadcast %49 : vector<1x32xf32> to vector<16x32xf32>
    %62 = arith.addf %60, %61 : vector<16x32xf32>
    %cst_30 = arith.constant 0.000000e+00 : f32
    %63 = vector.broadcast %cst_30 : f32 to vector<16x32xf32>
    %64 = arith.maximumf %62, %63 : vector<16x32xf32>
    %65 = arith.addf %18, %64 : vector<16x32xf32>
    %cst_31 = arith.constant 0.000000e+00 : f32
    %66 = vector.broadcast %cst_31 : f32 to vector<16x32xf32>
    %67 = arith.maximumf %65, %66 : vector<16x32xf32>
    %cst_32 = arith.constant dense<0.000000e+00> : vector<8x32xf32>
    %68 = tpu.matmul %44, %67, %cst_32 {dimension_numbers = #tpu.dot_dimension_numbers<[1], [0], [0], [1], [0, 0, 1, 1], [], []>} : vector<8x16xf32>, vector<16x32xf32>, vector<8x32xf32> -> vector<8x32xf32>
    %cst_33 = arith.constant dense<0.000000e+00> : vector<8x32xf32>
    %69 = tpu.matmul %68, %46, %cst_33 {dimension_numbers = #tpu.dot_dimension_numbers<[1], [0], [0], [1], [0, 0, 1, 1], [], []>} : vector<8x32xf32>, vector<32x32xf32>, vector<8x32xf32> -> vector<8x32xf32>
    %70 = vector.broadcast %47 : vector<1x32xf32> to vector<8x32xf32>
    %71 = arith.addf %69, %70 : vector<8x32xf32>
    %cst_34 = arith.constant 0.000000e+00 : f32
    %72 = vector.broadcast %cst_34 : f32 to vector<8x32xf32>
    %73 = arith.maximumf %71, %72 : vector<8x32xf32>
    %74 = arith.addf %58, %73 : vector<8x32xf32>
    %cst_35 = arith.constant 0.000000e+00 : f32
    %75 = vector.broadcast %cst_35 : f32 to vector<8x32xf32>
    %76 = arith.maximumf %74, %75 : vector<8x32xf32>
    %cst_36 = arith.constant dense<0.000000e+00> : vector<8x32xf32>
    %77 = tpu.matmul %76, %48, %cst_36 {dimension_numbers = #tpu.dot_dimension_numbers<[1], [0], [0], [1], [0, 0, 1, 1], [], []>} : vector<8x32xf32>, vector<32x32xf32>, vector<8x32xf32> -> vector<8x32xf32>
    %cst_37 = arith.constant dense<0.000000e+00> : vector<16x32xf32>
    %78 = tpu.matmul %45, %77, %cst_37 {dimension_numbers = #tpu.dot_dimension_numbers<[1], [0], [0], [1], [0, 0, 1, 1], [], []>} : vector<16x8xf32>, vector<8x32xf32>, vector<16x32xf32> -> vector<16x32xf32>
    %79 = vector.broadcast %49 : vector<1x32xf32> to vector<16x32xf32>
    %80 = arith.addf %78, %79 : vector<16x32xf32>
    %cst_38 = arith.constant 0.000000e+00 : f32
    %81 = vector.broadcast %cst_38 : f32 to vector<16x32xf32>
    %82 = arith.maximumf %80, %81 : vector<16x32xf32>
    %83 = arith.addf %67, %82 : vector<16x32xf32>
    %cst_39 = arith.constant 0.000000e+00 : f32
    %84 = vector.broadcast %cst_39 : f32 to vector<16x32xf32>
    %85 = arith.maximumf %83, %84 : vector<16x32xf32>
    %c0_40 = arith.constant 0 : index
    %c0_41 = arith.constant 0 : index
    %86 = vector.load %arg12[%c0_40, %c0_41] : memref<16x32xf32, #tpu.memory_space<vmem>>, vector<16x32xf32>
    tpu.vector_store %arg12[%c0_40, %c0_41], %85 {strides = array<i32>} : memref<16x32xf32, #tpu.memory_space<vmem>>, vector<16x32xf32>,
    %c0_42 = arith.constant 0 : index
    %c0_43 = arith.constant 0 : index
    %87 = vector.load %arg13[%c0_42, %c0_43] : memref<8x32xf32, #tpu.memory_space<vmem>>, vector<8x32xf32>
    tpu.vector_store %arg13[%c0_42, %c0_43], %76 {strides = array<i32>} : memref<8x32xf32, #tpu.memory_space<vmem>>, vector<8x32xf32>,
    return
  }
}

</mosaic_0001>

<llo_original>
// kernel: tpu_custom_call.1
$region0: #{tpu_custom_call.1}
  #allocation0 [shape = 'u32[]', space=smem, size = 0x4, offset = 0x4, fixed_abs, tag = 'smem constant byte address 0x4 - core index']
  #allocation1 [shape = 'u32[144,128]{1,0:T(1,128)}', space=vmem, size = 0x12000, scoped, tag = 'internal scratch']
  %s0 = inlined_call_operand.vmem [shape: f32[16,2], index: 0, kind: input, shape index: {}]
  %s1 = inlined_call_operand.vmem [shape: f32[8,3], index: 1, kind: input, shape index: {}]
  %s2 = inlined_call_operand.hbm [shape: f32[8,16], index: 2, kind: input, shape index: {}]
  %s3 = inlined_call_operand.vmem [shape: f32[16,8], index: 3, kind: input, shape index: {}]
  %s4 = inlined_call_operand.hbm [shape: f32[2,32], index: 4, kind: input, shape index: {}]
  %s5 = inlined_call_operand.vmem [shape: f32[1,32], index: 5, kind: input, shape index: {}]
  %s6 = inlined_call_operand.vmem [shape: f32[3,32], index: 6, kind: input, shape index: {}]
  %s7 = inlined_call_operand.vmem [shape: f32[1,32], index: 7, kind: input, shape index: {}]
  %s8 = inlined_call_operand.vmem [shape: f32[32,32], index: 8, kind: input, shape index: {}]
  %s9 = inlined_call_operand.vmem [shape: f32[1,32], index: 9, kind: input, shape index: {}]
  %s10 = inlined_call_operand.vmem [shape: f32[32,32], index: 10, kind: input, shape index: {}]
  %s11 = inlined_call_operand.vmem [shape: f32[1,32], index: 11, kind: input, shape index: {}]
  %s12 = inlined_call_operand.hbm [shape: f32[16,32], index: 12, kind: output, shape index: {0}]
  %s13 = inlined_call_operand.hbm [shape: f32[8,32], index: 13, kind: output, shape index: {1}]
  %14 = xla_tuple %s12, %s13
  %s15 = sld [smem:[#allocation0]]
  $region74: #{tpu_custom_call.1} parent=0
    _
  %s17 = ssub.s32 1, %s15
  %s18 = scalar_select 0, %s17, %s15
  $region1: #{tpu_custom_call.1} parent=0
    #allocation2 [shape = 'u8[4096]{0}', space=vmem, size = 0x1000, scoped, tag = 'input window, operand 2, single buffered']
    #allocation3 [shape = 's32[1]{0}', space=sflag, size = 0x4, scoped, tag = 'scoped memory for tpu_custom_call.1']
    #allocation4 [shape = 's32[1]{0}', space=sflag, size = 0x4, scoped, tag = 'scoped memory for tpu_custom_call.1']
    #allocation5 [shape = 'u8[1024]{0}', space=vmem, size = 0x400, scoped, tag = 'input window, operand 4, single buffered']
    #allocation6 [shape = 's32[1]{0}', space=sflag, size = 0x4, scoped, tag = 'scoped memory for tpu_custom_call.1']
    #allocation7 [shape = 'u8[8192]{0}', space=vmem, size = 0x2000, scoped, tag = 'output window, operand 0, single buffered']
    #allocation8 [shape = 'u8[4096]{0}', space=vmem, size = 0x1000, scoped, tag = 'output window, operand 1, single buffered']
    #allocation9 [shape = 's32[1]{0}', space=sflag, size = 0x4, scoped, tag = 'scoped memory for tpu_custom_call.1']
    %19 = vsyncpa [#allocation3], 0
    %20 = vsyncpa [#allocation6], 0
    %21 = vsyncpa [#allocation4], 0
    %22 = vsyncpa [#allocation9], 0
    // Predicated region
    $region2: #{tpu_custom_call.1} parent=1 // pred_check
      _
    $region3: #{tpu_custom_call.1} parent=1 // pred_check_branch
      %24 = sbr.rel (0) target = $region5
    $region4: #{tpu_custom_call.1} parent=1 // pred_region
      _
    $region5: #{tpu_custom_call.1} parent=1 // pred_fallthru
      _
    // Predicated region
    $region6: #{tpu_custom_call.1} parent=1 // pred_check
      _
    $region7: #{tpu_custom_call.1} parent=1 // pred_check_branch
      %26 = sbr.rel (0) target = $region9
    $region8: #{tpu_custom_call.1} parent=1 // pred_region
      _
    $region9: #{tpu_custom_call.1} parent=1 // pred_fallthru
      _
    // Predicated region
    $region10: #{tpu_custom_call.1} parent=1 // pred_check
      _
    $region11: #{tpu_custom_call.1} parent=1 // pred_check_branch
      %28 = sbr.rel (0) target = $region13
    $region12: #{tpu_custom_call.1} parent=1 // pred_region
      %s30 = ssub.s32 128, 128
      %31 = vsyncadd [#allocation3], %s30
      %s33 = sshll.u32 [#allocation2], 4
      %s34 = int_to_ptr.vmem [resolvable:$true] %s33
      %36 = dma.hbm_to_vmem [thread:$0]  %s2, 128, %s34, [#allocation3]
    $region13: #{tpu_custom_call.1} parent=1 // pred_fallthru
      _
    // Predicated region
    $region14: #{tpu_custom_call.1} parent=1 // pred_check
      _
    $region15: #{tpu_custom_call.1} parent=1 // pred_check_branch
      %38 = sbr.rel (0) target = $region17
    $region16: #{tpu_custom_call.1} parent=1 // pred_region
      _
    $region17: #{tpu_custom_call.1} parent=1 // pred_fallthru
      _
    // Predicated region
    $region18: #{tpu_custom_call.1} parent=1 // pred_check
      _
    $region19: #{tpu_custom_call.1} parent=1 // pred_check_branch
      %40 = sbr.rel (0) target = $region21
    $region20: #{tpu_custom_call.1} parent=1 // pred_region
      %s42 = ssub.s32 32, 32
      %43 = vsyncadd [#allocation6], %s42
      %s45 = sshll.u32 [#allocation5], 4
      %s46 = int_to_ptr.vmem [resolvable:$true] %s45
      %48 = dma.hbm_to_vmem [thread:$0]  %s4, 32, %s46, [#allocation6]
    $region21: #{tpu_custom_call.1} parent=1 // pred_fallthru
      _
    // Predicated region
    $region22: #{tpu_custom_call.1} parent=1 // pred_check
      _
    $region23: #{tpu_custom_call.1} parent=1 // pred_check_branch
      %50 = sbr.rel (0) target = $region25
    $region24: #{tpu_custom_call.1} parent=1 // pred_region
      _
    $region25: #{tpu_custom_call.1} parent=1 // pred_fallthru
      _
    // Predicated region
    $region26: #{tpu_custom_call.1} parent=1 // pred_check
      _
    $region27: #{tpu_custom_call.1} parent=1 // pred_check_branch
      %52 = sbr.rel (0) target = $region29
    $region28: #{tpu_custom_call.1} parent=1 // pred_region
      _
    $region29: #{tpu_custom_call.1} parent=1 // pred_fallthru
      _
    // Predicated region
    $region30: #{tpu_custom_call.1} parent=1 // pred_check
      _
    $region31: #{tpu_custom_call.1} parent=1 // pred_check_branch
      %54 = sbr.rel (0) target = $region33
    $region32: #{tpu_custom_call.1} parent=1 // pred_region
      _
    $region33: #{tpu_custom_call.1} parent=1 // pred_fallthru
      _
    // Predicated region
    $region34: #{tpu_custom_call.1} parent=1 // pred_check
      _
    $region35: #{tpu_custom_call.1} parent=1 // pred_check_branch
      %56 = sbr.rel (0) target = $region37
    $region36: #{tpu_custom_call.1} parent=1 // pred_region
      _
    $region37: #{tpu_custom_call.1} parent=1 // pred_fallthru
      _
    // Predicated region
    $region38: #{tpu_custom_call.1} parent=1 // pred_check
      _
    $region39: #{tpu_custom_call.1} parent=1 // pred_check_branch
      %58 = sbr.rel (0) target = $region41
    $region40: #{tpu_custom_call.1} parent=1 // pred_region
      _
    $region41: #{tpu_custom_call.1} parent=1 // pred_fallthru
      _
    // Predicated region
    $region42: #{tpu_custom_call.1} parent=1 // pred_check
      _
    $region43: #{tpu_custom_call.1} parent=1 // pred_check_branch
      %60 = sbr.rel (0) target = $region45
    $region44: #{tpu_custom_call.1} parent=1 // pred_region
      _
    $region45: #{tpu_custom_call.1} parent=1 // pred_fallthru
      _
    // Predicated region
    $region46: #{tpu_custom_call.1} parent=1 // pred_check
      _
    $region47: #{tpu_custom_call.1} parent=1 // pred_check_branch
      %62 = sbr.rel (0) target = $region49
    $region48: #{tpu_custom_call.1} parent=1 // pred_region
      _
    $region49: #{tpu_custom_call.1} parent=1 // pred_fallthru
      _
    // Predicated region
    $region50: #{tpu_custom_call.1} parent=1 // pred_check
      _
    $region51: #{tpu_custom_call.1} parent=1 // pred_check_branch
      %64 = sbr.rel (0) target = $region53
    $region52: #{tpu_custom_call.1} parent=1 // pred_region
      %65 = dma.done [#allocation3], 128
    $region53: #{tpu_custom_call.1} parent=1 // pred_fallthru
      _
    // Predicated region
    $region54: #{tpu_custom_call.1} parent=1 // pred_check
      _
    $region55: #{tpu_custom_call.1} parent=1 // pred_check_branch
      %67 = sbr.rel (0) target = $region57
    $region56: #{tpu_custom_call.1} parent=1 // pred_region
      %68 = dma.done [#allocation6], 32
    $region57: #{tpu_custom_call.1} parent=1 // pred_fallthru
      _
    %v69 = vld [vmem:[%s0] sm:$0xff]
    %v70 = vld [vmem:[%s0 + $0x8] sm:$0xff]
    %v71 = vld [vmem:[#allocation5] sm:$0x3]
    %v72 = vld [vmem:[%s5] sm:$0x1]
    %v74 = vlaneseq
    %v75 = vshrl.u32 %v74, 7
    %v76 = vsub.s32 0, %v75
    %v77 = vrot.slane %v72, %v76
    %80 = vset.pattern.permute.xlu0 0
    %81 = vperm.xlu0 %80, %v69
    %v82 = vpop.permute.xlu0 %81
    %85 = vset.pattern.permute.xlu0 0
    %86 = vperm.xlu0 %85, %v70
    %v87 = vpop.permute.xlu0 %86
    %v89 = vlaneseq
    %v90 = vshrl.u32 %v89, 7
    %v91 = vsub.s32 0, %v90
    %v92 = vrot.slane %v71, %v91
    %v93 = vmul.f32 %v82, %v92
    %v94 = vmul.f32 %v87, %v92
    %v95 = vadd.f32 %v77, %v93
    %v96 = vadd.f32 %v77, %v94
    %97 = vset.pattern.permute.xlu0 1
    %98 = vperm.xlu0 %97, %v69
    %v99 = vpop.permute.xlu0 %98
    %101 = vset.pattern.permute.xlu0 1
    %102 = vperm.xlu0 %101, %v70
    %v103 = vpop.permute.xlu0 %102
    %v105 = vlaneseq
    %v106 = vshrl.u32 %v105, 7
    %v107 = vsub.s32 1, %v106
    %v108 = vrot.slane %v71, %v107
    %v109 = vmul.f32 %v99, %v108
    %v110 = vmul.f32 %v103, %v108
    %v111 = vadd.f32 %v95, %v109
    %v112 = vadd.f32 %v96, %v110
    %v113 = vmax.f32 %v111, 0.0
    %v114 = vmax.f32 %v112, 0.0
    %v115 = vld [vmem:[%s1] sm:$0xff]
    %v116 = vld [vmem:[%s6] sm:$0x7]
    %v117 = vld [vmem:[%s7] sm:$0x1]
    %v119 = vlaneseq
    %v120 = vshrl.u32 %v119, 7
    %v121 = vsub.s32 0, %v120
    %v122 = vrot.slane %v117, %v121
    %125 = vset.pattern.permute.xlu0 0
    %126 = vperm.xlu0 %125, %v115
    %v127 = vpop.permute.xlu0 %126
    %v129 = vlaneseq
    %v130 = vshrl.u32 %v129, 7
    %v131 = vsub.s32 0, %v130
    %v132 = vrot.slane %v116, %v131
    %v133 = vmul.f32 %v127, %v132
    %v134 = vadd.f32 %v122, %v133
    %135 = vset.pattern.permute.xlu0 1
    %136 = vperm.xlu0 %135, %v115
    %v137 = vpop.permute.xlu0 %136
    %v139 = vlaneseq
    %v140 = vshrl.u32 %v139, 7
    %v141 = vsub.s32 1, %v140
    %v142 = vrot.slane %v116, %v141
    %v143 = vmul.f32 %v137, %v142
    %v144 = vadd.f32 %v134, %v143
    %145 = vset.pattern.permute.xlu0 2
    %146 = vperm.xlu0 %145, %v115
    %v147 = vpop.permute.xlu0 %146
    %v149 = vlaneseq
    %v150 = vshrl.u32 %v149, 7
    %v151 = vsub.s32 2, %v150
    %v152 = vrot.slane %v116, %v151
    %v153 = vmul.f32 %v147, %v152
    %v154 = vadd.f32 %v144, %v153
    %v155 = vmax.f32 %v154, 0.0
    %v156 = vld [vmem:[#allocation2] sm:$0xff]
    %v157 = vld [vmem:[%s3] sm:$0xff]
    %v158 = vld [vmem:[%s3 + $0x8] sm:$0xff]
    %v159 = vld [vmem:[%s8] sm:$0xff]
    %v160 = vld [vmem:[%s8 + $0x8] sm:$0xff]
    %v161 = vld [vmem:[%s8 + $0x10] sm:$0xff]
    %v162 = vld [vmem:[%s8 + $0x18] sm:$0xff]
    %v163 = vld [vmem:[%s9] sm:$0x1]
    %v164 = vld [vmem:[%s10] sm:$0xff]
    %v165 = vld [vmem:[%s10 + $0x8] sm:$0xff]
    %v166 = vld [vmem:[%s10 + $0x10] sm:$0xff]
    %v167 = vld [vmem:[%s10 + $0x18] sm:$0xff]
    %v168 = vld [vmem:[%s11] sm:$0x1]
    %vm169 = vcmask 130048
    %v171 = vsel %vm169, %v156, 0
    %173 = vmatprep.subr.mxu0 0.0
    %174 = vmatpush1.msra.mxu0 %v113
    %175 = vmatprep.subr.mxu0 0.0
    %176 = vmatpush1.msra.mxu0 %v114
    %177 = vmatprep.subr.mxu0 0.0
    %178 = vmatpush1.msra.mxu0 0.0
    %179 = vmatprep.subr.mxu0 0.0
    %180 = vmatpush1.msra.mxu0 0.0
    %181 = vmatprep.subr.mxu0 0.0
    %182 = vmatpush1.msra.mxu0 0.0
    %183 = vmatprep.subr.mxu0 0.0
    %184 = vmatpush1.msra.mxu0 0.0
    %185 = vmatprep.subr.mxu0 0.0
    %186 = vmatpush1.msra.mxu0 0.0
    %187 = vmatprep.subr.mxu0 0.0
    %188 = vmatpush1.msra.mxu0 0.0
    %189 = vmatprep.subr.mxu0 0.0
    %190 = vmatpush1.msra.mxu0 0.0
    %191 = vmatprep.subr.mxu0 0.0
    %192 = vmatpush1.msra.mxu0 0.0
    %193 = vmatprep.subr.mxu0 0.0
    %194 = vmatpush1.msra.mxu0 0.0
    %195 = vmatprep.subr.mxu0 0.0
    %196 = vmatpush1.msra.mxu0 0.0
    %197 = vmatprep.subr.mxu0 0.0
    %198 = vmatpush1.msra.mxu0 0.0
    %199 = vmatprep.subr.mxu0 0.0
    %200 = vmatpush1.msra.mxu0 0.0
    %201 = vmatprep.subr.mxu0 0.0
    %202 = vmatpush1.msra.mxu0 0.0
    %203 = vmatprep.subr.mxu0 0.0
    %204 = vmatpush1.msra.mxu0 0.0
    %205 = vmatprep.subr.mxu0 0.0
    %206 = vmatpush1.msra.mxu0 0.0
    %207 = vmatprep.subr.mxu0 0.0
    %208 = vmatpush1.msra.mxu0 0.0
    %209 = vmatprep.subr.mxu0 0.0
    %210 = vmatpush1.msra.mxu0 0.0
    %211 = vmatprep.subr.mxu0 0.0
    %212 = vmatpush1.msra.mxu0 0.0
    %213 = vmatprep.subr.mxu0 0.0
    %214 = vmatpush1.msra.mxu0 0.0
    %215 = vmatprep.subr.mxu0 0.0
    %216 = vmatpush1.msra.mxu0 0.0
    %217 = vmatprep.subr.mxu0 0.0
    %218 = vmatpush1.msra.mxu0 0.0
    %219 = vmatprep.subr.mxu0 0.0
    %220 = vmatpush1.msra.mxu0 0.0
    %221 = vmatprep.subr.mxu0 0.0
    %222 = vmatpush1.msra.mxu0 0.0
    %223 = vmatprep.subr.mxu0 0.0
    %224 = vmatpush1.msra.mxu0 0.0
    %225 = vmatprep.subr.mxu0 0.0
    %226 = vmatpush1.msra.mxu0 0.0
    %227 = vmatprep.subr.mxu0 0.0
    %228 = vmatpush1.msra.mxu0 0.0
    %229 = vmatprep.subr.mxu0 0.0
    %230 = vmatpush1.msra.mxu0 0.0
    %231 = vmatprep.subr.mxu0 0.0
    %232 = vmatpush1.msra.mxu0 0.0
    %233 = vmatprep.subr.mxu0 0.0
    %234 = vmatpush1.msra.mxu0 0.0
    %235 = vmatprep.subr.mxu0 0.0
    %236 = vmatpush1.msra.mxu0 0.0
    %237 = vmatprep.mubr.f32.mxu0 0.0
    %238 = vmatmul.mubr.f32.gmra.mrb[0].mxu0 %v171
    %v239 = vpop.f32.mrb[0].mxu0
    %v240 = vadd.f32 0.0, %v239
    %v241 = vpop.f32.mrb[0].mxu0
    %242 = vdwg.mxu0
    %v244 = vlaneseq
    %v245 = vshrl.u32 %v244, 7
    %v246 = vsub.s32 0, %v245
    %v247 = vrot.slane %v163, %v246
    %vm249 = vcmask 261120
    %v251 = vsel %vm249, %v240, 0
    %253 = vmatprep.subr.mxu0 0.0
    %254 = vmatpush1.msra.mxu0 %v159
    %255 = vmatprep.subr.mxu0 0.0
    %256 = vmatpush1.msra.mxu0 %v160
    %257 = vmatprep.subr.mxu0 0.0
    %258 = vmatpush1.msra.mxu0 %v161
    %259 = vmatprep.subr.mxu0 0.0
    %260 = vmatpush1.msra.mxu0 %v162
    %261 = vmatprep.subr.mxu0 0.0
    %262 = vmatpush1.msra.mxu0 0.0
    %263 = vmatprep.subr.mxu0 0.0
    %264 = vmatpush1.msra.mxu0 0.0
    %265 = vmatprep.subr.mxu0 0.0
    %266 = vmatpush1.msra.mxu0 0.0
    %267 = vmatprep.subr.mxu0 0.0
    %268 = vmatpush1.msra.mxu0 0.0
    %269 = vmatprep.subr.mxu0 0.0
    %270 = vmatpush1.msra.mxu0 0.0
    %271 = vmatprep.subr.mxu0 0.0
    %272 = vmatpush1.msra.mxu0 0.0
    %273 = vmatprep.subr.mxu0 0.0
    %274 = vmatpush1.msra.mxu0 0.0
    %275 = vmatprep.subr.mxu0 0.0
    %276 = vmatpush1.msra.mxu0 0.0
    %277 = vmatprep.subr.mxu0 0.0
    %278 = vmatpush1.msra.mxu0 0.0
    %279 = vmatprep.subr.mxu0 0.0
    %280 = vmatpush1.msra.mxu0 0.0
    %281 = vmatprep.subr.mxu0 0.0
    %282 = vmatpush1.msra.mxu0 0.0
    %283 = vmatprep.subr.mxu0 0.0
    %284 = vmatpush1.msra.mxu0 0.0
    %285 = vmatprep.subr.mxu0 0.0
    %286 = vmatpush1.msra.mxu0 0.0
    %287 = vmatprep.subr.mxu0 0.0
    %288 = vmatpush1.msra.mxu0 0.0
    %289 = vmatprep.subr.mxu0 0.0
    %290 = vmatpush1.msra.mxu0 0.0
    %291 = vmatprep.subr.mxu0 0.0
    %292 = vmatpush1.msra.mxu0 0.0
    %293 = vmatprep.subr.mxu0 0.0
    %294 = vmatpush1.msra.mxu0 0.0
    %295 = vmatprep.subr.mxu0 0.0
    %296 = vmatpush1.msra.mxu0 0.0
    %297 = vmatprep.subr.mxu0 0.0
    %298 = vmatpush1.msra.mxu0 0.0
    %299 = vmatprep.subr.mxu0 0.0
    %300 = vmatpush1.msra.mxu0 0.0
    %301 = vmatprep.subr.mxu0 0.0
    %302 = vmatpush1.msra.mxu0 0.0
    %303 = vmatprep.subr.mxu0 0.0
    %304 = vmatpush1.msra.mxu0 0.0
    %305 = vmatprep.subr.mxu0 0.0
    %306 = vmatpush1.msra.mxu0 0.0
    %307 = vmatprep.subr.mxu0 0.0
    %308 = vmatpush1.msra.mxu0 0.0
    %309 = vmatprep.subr.mxu0 0.0
    %310 = vmatpush1.msra.mxu0 0.0
    %311 = vmatprep.subr.mxu0 0.0
    %312 = vmatpush1.msra.mxu0 0.0
    %313 = vmatprep.subr.mxu0 0.0
    %314 = vmatpush1.msra.mxu0 0.0
    %315 = vmatprep.subr.mxu0 0.0
    %316 = vmatpush1.msra.mxu0 0.0
    %317 = vmatprep.mubr.f32.mxu0 0.0
    %318 = vmatmul.mubr.f32.gmra.mrb[0].mxu0 %v251
    %v319 = vpop.f32.mrb[0].mxu0
    %v320 = vadd.f32 %v247, %v319
    %v321 = vpop.f32.mrb[0].mxu0
    %322 = vdwg.mxu0
    %v323 = vmax.f32 %v320, 0.0
    %v324 = vadd.f32 %v155, %v323
    %v325 = vmax.f32 %v324, 0.0
    %v327 = vsel %vm249, %v325, 0
    %329 = vmatprep.subr.mxu0 0.0
    %330 = vmatpush1.msra.mxu0 %v164
    %331 = vmatprep.subr.mxu0 0.0
    %332 = vmatpush1.msra.mxu0 %v165
    %333 = vmatprep.subr.mxu0 0.0
    %334 = vmatpush1.msra.mxu0 %v166
    %335 = vmatprep.subr.mxu0 0.0
    %336 = vmatpush1.msra.mxu0 %v167
    %337 = vmatprep.subr.mxu0 0.0
    %338 = vmatpush1.msra.mxu0 0.0
    %339 = vmatprep.subr.mxu0 0.0
    %340 = vmatpush1.msra.mxu0 0.0
    %341 = vmatprep.subr.mxu0 0.0
    %342 = vmatpush1.msra.mxu0 0.0
    %343 = vmatprep.subr.mxu0 0.0
    %344 = vmatpush1.msra.mxu0 0.0
    %345 = vmatprep.subr.mxu0 0.0
    %346 = vmatpush1.msra.mxu0 0.0
    %347 = vmatprep.subr.mxu0 0.0
    %348 = vmatpush1.msra.mxu0 0.0
    %349 = vmatprep.subr.mxu0 0.0
    %350 = vmatpush1.msra.mxu0 0.0
    %351 = vmatprep.subr.mxu0 0.0
    %352 = vmatpush1.msra.mxu0 0.0
    %353 = vmatprep.subr.mxu0 0.0
    %354 = vmatpush1.msra.mxu0 0.0
    %355 = vmatprep.subr.mxu0 0.0
    %356 = vmatpush1.msra.mxu0 0.0
    %357 = vmatprep.subr.mxu0 0.0
    %358 = vmatpush1.msra.mxu0 0.0
    %359 = vmatprep.subr.mxu0 0.0
    %360 = vmatpush1.msra.mxu0 0.0
    %361 = vmatprep.subr.mxu0 0.0
    %362 = vmatpush1.msra.mxu0 0.0
    %363 = vmatprep.subr.mxu0 0.0
    %364 = vmatpush1.msra.mxu0 0.0
    %365 = vmatprep.subr.mxu0 0.0
    %366 = vmatpush1.msra.mxu0 0.0
    %367 = vmatprep.subr.mxu0 0.0
    %368 = vmatpush1.msra.mxu0 0.0
    %369 = vmatprep.subr.mxu0 0.0
    %370 = vmatpush1.msra.mxu0 0.0
    %371 = vmatprep.subr.mxu0 0.0
    %372 = vmatpush1.msra.mxu0 0.0
    %373 = vmatprep.subr.mxu0 0.0
    %374 = vmatpush1.msra.mxu0 0.0
    %375 = vmatprep.subr.mxu0 0.0
    %376 = vmatpush1.msra.mxu0 0.0
    %377 = vmatprep.subr.mxu0 0.0
    %378 = vmatpush1.msra.mxu0 0.0
    %379 = vmatprep.subr.mxu0 0.0
    %380 = vmatpush1.msra.mxu0 0.0
    %381 = vmatprep.subr.mxu0 0.0
    %382 = vmatpush1.msra.mxu0 0.0
    %383 = vmatprep.subr.mxu0 0.0
    %384 = vmatpush1.msra.mxu0 0.0
    %385 = vmatprep.subr.mxu0 0.0
    %386 = vmatpush1.msra.mxu0 0.0
    %387 = vmatprep.subr.mxu0 0.0
    %388 = vmatpush1.msra.mxu0 0.0
    %389 = vmatprep.subr.mxu0 0.0
    %390 = vmatpush1.msra.mxu0 0.0
    %391 = vmatprep.subr.mxu0 0.0
    %392 = vmatpush1.msra.mxu0 0.0
    %393 = vmatprep.mubr.f32.mxu0 0.0
    %394 = vmatmul.mubr.f32.gmra.mrb[0].mxu0 %v327
    %v395 = vpop.f32.mrb[0].mxu0
    %v396 = vadd.f32 0.0, %v395
    %v397 = vpop.f32.mrb[0].mxu0
    %398 = vdwg.mxu0
    %v400 = vlaneseq
    %v401 = vshrl.u32 %v400, 7
    %v402 = vsub.s32 0, %v401
    %v403 = vrot.slane %v168, %v402
    %vm405 = vcmask 64512
    %v407 = vsel %vm405, %v157, 0
    %v410 = vsel %vm405, %v158, 0
    %412 = vmatprep.subr.mxu0 0.0
    %413 = vmatpush1.msra.mxu0 %v396
    %414 = vmatprep.subr.mxu0 0.0
    %415 = vmatpush1.msra.mxu0 0.0
    %416 = vmatprep.subr.mxu0 0.0
    %417 = vmatpush1.msra.mxu0 0.0
    %418 = vmatprep.subr.mxu0 0.0
    %419 = vmatpush1.msra.mxu0 0.0
    %420 = vmatprep.subr.mxu0 0.0
    %421 = vmatpush1.msra.mxu0 0.0
    %422 = vmatprep.subr.mxu0 0.0
    %423 = vmatpush1.msra.mxu0 0.0
    %424 = vmatprep.subr.mxu0 0.0
    %425 = vmatpush1.msra.mxu0 0.0
    %426 = vmatprep.subr.mxu0 0.0
    %427 = vmatpush1.msra.mxu0 0.0
    %428 = vmatprep.subr.mxu0 0.0
    %429 = vmatpush1.msra.mxu0 0.0
    %430 = vmatprep.subr.mxu0 0.0
    %431 = vmatpush1.msra.mxu0 0.0
    %432 = vmatprep.subr.mxu0 0.0
    %433 = vmatpush1.msra.mxu0 0.0
    %434 = vmatprep.subr.mxu0 0.0
    %435 = vmatpush1.msra.mxu0 0.0
    %436 = vmatprep.subr.mxu0 0.0
    %437 = vmatpush1.msra.mxu0 0.0
    %438 = vmatprep.subr.mxu0 0.0
    %439 = vmatpush1.msra.mxu0 0.0
    %440 = vmatprep.subr.mxu0 0.0
    %441 = vmatpush1.msra.mxu0 0.0
    %442 = vmatprep.subr.mxu0 0.0
    %443 = vmatpush1.msra.mxu0 0.0
    %444 = vmatprep.subr.mxu0 0.0
    %445 = vmatpush1.msra.mxu0 0.0
    %446 = vmatprep.subr.mxu0 0.0
    %447 = vmatpush1.msra.mxu0 0.0
    %448 = vmatprep.subr.mxu0 0.0
    %449 = vmatpush1.msra.mxu0 0.0
    %450 = vmatprep.subr.mxu0 0.0
    %451 = vmatpush1.msra.mxu0 0.0
    %452 = vmatprep.subr.mxu0 0.0
    %453 = vmatpush1.msra.mxu0 0.0
    %454 = vmatprep.subr.mxu0 0.0
    %455 = vmatpush1.msra.mxu0 0.0
    %456 = vmatprep.subr.mxu0 0.0
    %457 = vmatpush1.msra.mxu0 0.0
    %458 = vmatprep.subr.mxu0 0.0
    %459 = vmatpush1.msra.mxu0 0.0
    %460 = vmatprep.subr.mxu0 0.0
    %461 = vmatpush1.msra.mxu0 0.0
    %462 = vmatprep.subr.mxu0 0.0
    %463 = vmatpush1.msra.mxu0 0.0
    %464 = vmatprep.subr.mxu0 0.0
    %465 = vmatpush1.msra.mxu0 0.0
    %466 = vmatprep.subr.mxu0 0.0
    %467 = vmatpush1.msra.mxu0 0.0
    %468 = vmatprep.subr.mxu0 0.0
    %469 = vmatpush1.msra.mxu0 0.0
    %470 = vmatprep.subr.mxu0 0.0
    %471 = vmatpush1.msra.mxu0 0.0
    %472 = vmatprep.subr.mxu0 0.0
    %473 = vmatpush1.msra.mxu0 0.0
    %474 = vmatprep.subr.mxu0 0.0
    %475 = vmatpush1.msra.mxu0 0.0
    %476 = vmatprep.mubr.f32.mxu0 0.0
    %477 = vmatmul.mubr.f32.gmra.mrb[0].mxu0 %v407
    %v478 = vpop.f32.mrb[0].mxu0
    %v479 = vadd.f32 %v403, %v478
    %v480 = vpop.f32.mrb[0].mxu0
    %481 = vmatprep.mubr.f32.mxu0 0.0
    %482 = vmatmul.mubr.f32.gmra.mrb[0].mxu0 %v410
    %v483 = vpop.f32.mrb[0].mxu0
    %v484 = vadd.f32 %v403, %v483
    %v485 = vpop.f32.mrb[0].mxu0
    %486 = vdwg.mxu0
    %v487 = vmax.f32 %v479, 0.0
    %v488 = vmax.f32 %v484, 0.0
    %v489 = vadd.f32 %v113, %v487
    %v490 = vadd.f32 %v114, %v488
    %v491 = vmax.f32 %v489, 0.0
    %v492 = vmax.f32 %v490, 0.0
    %493 = vmatprep.subr.mxu0 0.0
    %494 = vmatpush1.msra.mxu0 %v491
    %495 = vmatprep.subr.mxu0 0.0
    %496 = vmatpush1.msra.mxu0 %v492
    %497 = vmatprep.subr.mxu0 0.0
    %498 = vmatpush1.msra.mxu0 0.0
    %499 = vmatprep.subr.mxu0 0.0
    %500 = vmatpush1.msra.mxu0 0.0
    %501 = vmatprep.subr.mxu0 0.0
    %502 = vmatpush1.msra.mxu0 0.0
    %503 = vmatprep.subr.mxu0 0.0
    %504 = vmatpush1.msra.mxu0 0.0
    %505 = vmatprep.subr.mxu0 0.0
    %506 = vmatpush1.msra.mxu0 0.0
    %507 = vmatprep.subr.mxu0 0.0
    %508 = vmatpush1.msra.mxu0 0.0
    %509 = vmatprep.subr.mxu0 0.0
    %510 = vmatpush1.msra.mxu0 0.0
    %511 = vmatprep.subr.mxu0 0.0
    %512 = vmatpush1.msra.mxu0 0.0
    %513 = vmatprep.subr.mxu0 0.0
    %514 = vmatpush1.msra.mxu0 0.0
    %515 = vmatprep.subr.mxu0 0.0
    %516 = vmatpush1.msra.mxu0 0.0
    %517 = vmatprep.subr.mxu0 0.0
    %518 = vmatpush1.msra.mxu0 0.0
    %519 = vmatprep.subr.mxu0 0.0
    %520 = vmatpush1.msra.mxu0 0.0
    %521 = vmatprep.subr.mxu0 0.0
    %522 = vmatpush1.msra.mxu0 0.0
    %523 = vmatprep.subr.mxu0 0.0
    %524 = vmatpush1.msra.mxu0 0.0
    %525 = vmatprep.subr.mxu0 0.0
    %526 = vmatpush1.msra.mxu0 0.0
    %527 = vmatprep.subr.mxu0 0.0
    %528 = vmatpush1.msra.mxu0 0.0
    %529 = vmatprep.subr.mxu0 0.0
    %530 = vmatpush1.msra.mxu0 0.0
    %531 = vmatprep.subr.mxu0 0.0
    %532 = vmatpush1.msra.mxu0 0.0
    %533 = vmatprep.subr.mxu0 0.0
    %534 = vmatpush1.msra.mxu0 0.0
    %535 = vmatprep.subr.mxu0 0.0
    %536 = vmatpush1.msra.mxu0 0.0
    %537 = vmatprep.subr.mxu0 0.0
    %538 = vmatpush1.msra.mxu0 0.0
    %539 = vmatprep.subr.mxu0 0.0
    %540 = vmatpush1.msra.mxu0 0.0
    %541 = vmatprep.subr.mxu0 0.0
    %542 = vmatpush1.msra.mxu0 0.0
    %543 = vmatprep.subr.mxu0 0.0
    %544 = vmatpush1.msra.mxu0 0.0
    %545 = vmatprep.subr.mxu0 0.0
    %546 = vmatpush1.msra.mxu0 0.0
    %547 = vmatprep.subr.mxu0 0.0
    %548 = vmatpush1.msra.mxu0 0.0
    %549 = vmatprep.subr.mxu0 0.0
    %550 = vmatpush1.msra.mxu0 0.0
    %551 = vmatprep.subr.mxu0 0.0
    %552 = vmatpush1.msra.mxu0 0.0
    %553 = vmatprep.subr.mxu0 0.0
    %554 = vmatpush1.msra.mxu0 0.0
    %555 = vmatprep.subr.mxu0 0.0
    %556 = vmatpush1.msra.mxu0 0.0
    %557 = vmatprep.mubr.f32.mxu0 0.0
    %558 = vmatmul.mubr.f32.gmra.mrb[0].mxu0 %v171
    %v559 = vpop.f32.mrb[0].mxu0
    %v560 = vadd.f32 0.0, %v559
    %v561 = vpop.f32.mrb[0].mxu0
    %562 = vdwg.mxu0
    %v564 = vsel %vm249, %v560, 0
    %566 = vmatprep.subr.mxu0 0.0
    %567 = vmatpush1.msra.mxu0 %v159
    %568 = vmatprep.subr.mxu0 0.0
    %569 = vmatpush1.msra.mxu0 %v160
    %570 = vmatprep.subr.mxu0 0.0
    %571 = vmatpush1.msra.mxu0 %v161
    %572 = vmatprep.subr.mxu0 0.0
    %573 = vmatpush1.msra.mxu0 %v162
    %574 = vmatprep.subr.mxu0 0.0
    %575 = vmatpush1.msra.mxu0 0.0
    %576 = vmatprep.subr.mxu0 0.0
    %577 = vmatpush1.msra.mxu0 0.0
    %578 = vmatprep.subr.mxu0 0.0
    %579 = vmatpush1.msra.mxu0 0.0
    %580 = vmatprep.subr.mxu0 0.0
    %581 = vmatpush1.msra.mxu0 0.0
    %582 = vmatprep.subr.mxu0 0.0
    %583 = vmatpush1.msra.mxu0 0.0
    %584 = vmatprep.subr.mxu0 0.0
    %585 = vmatpush1.msra.mxu0 0.0
    %586 = vmatprep.subr.mxu0 0.0
    %587 = vmatpush1.msra.mxu0 0.0
    %588 = vmatprep.subr.mxu0 0.0
    %589 = vmatpush1.msra.mxu0 0.0
    %590 = vmatprep.subr.mxu0 0.0
    %591 = vmatpush1.msra.mxu0 0.0
    %592 = vmatprep.subr.mxu0 0.0
    %593 = vmatpush1.msra.mxu0 0.0
    %594 = vmatprep.subr.mxu0 0.0
    %595 = vmatpush1.msra.mxu0 0.0
    %596 = vmatprep.subr.mxu0 0.0
    %597 = vmatpush1.msra.mxu0 0.0
    %598 = vmatprep.subr.mxu0 0.0
    %599 = vmatpush1.msra.mxu0 0.0
    %600 = vmatprep.subr.mxu0 0.0
    %601 = vmatpush1.msra.mxu0 0.0
    %602 = vmatprep.subr.mxu0 0.0
    %603 = vmatpush1.msra.mxu0 0.0
    %604 = vmatprep.subr.mxu0 0.0
    %605 = vmatpush1.msra.mxu0 0.0
    %606 = vmatprep.subr.mxu0 0.0
    %607 = vmatpush1.msra.mxu0 0.0
    %608 = vmatprep.subr.mxu0 0.0
    %609 = vmatpush1.msra.mxu0 0.0
    %610 = vmatprep.subr.mxu0 0.0
    %611 = vmatpush1.msra.mxu0 0.0
    %612 = vmatprep.subr.mxu0 0.0
    %613 = vmatpush1.msra.mxu0 0.0
    %614 = vmatprep.subr.mxu0 0.0
    %615 = vmatpush1.msra.mxu0 0.0
    %616 = vmatprep.subr.mxu0 0.0
    %617 = vmatpush1.msra.mxu0 0.0
    %618 = vmatprep.subr.mxu0 0.0
    %619 = vmatpush1.msra.mxu0 0.0
    %620 = vmatprep.subr.mxu0 0.0
    %621 = vmatpush1.msra.mxu0 0.0
    %622 = vmatprep.subr.mxu0 0.0
    %623 = vmatpush1.msra.mxu0 0.0
    %624 = vmatprep.subr.mxu0 0.0
    %625 = vmatpush1.msra.mxu0 0.0
    %626 = vmatprep.subr.mxu0 0.0
    %627 = vmatpush1.msra.mxu0 0.0
    %628 = vmatprep.subr.mxu0 0.0
    %629 = vmatpush1.msra.mxu0 0.0
    %630 = vmatprep.mubr.f32.mxu0 0.0
    %631 = vmatmul.mubr.f32.gmra.mrb[0].mxu0 %v564
    %v632 = vpop.f32.mrb[0].mxu0
    %v633 = vadd.f32 %v247, %v632
    %v634 = vpop.f32.mrb[0].mxu0
    %635 = vdwg.mxu0
    %v636 = vmax.f32 %v633, 0.0
    %v637 = vadd.f32 %v325, %v636
    %v638 = vmax.f32 %v637, 0.0
    %v640 = vsel %vm249, %v638, 0
    %642 = vmatprep.subr.mxu0 0.0
    %643 = vmatpush1.msra.mxu0 %v164
    %644 = vmatprep.subr.mxu0 0.0
    %645 = vmatpush1.msra.mxu0 %v165
    %646 = vmatprep.subr.mxu0 0.0
    %647 = vmatpush1.msra.mxu0 %v166
    %648 = vmatprep.subr.mxu0 0.0
    %649 = vmatpush1.msra.mxu0 %v167
    %650 = vmatprep.subr.mxu0 0.0
    %651 = vmatpush1.msra.mxu0 0.0
    %652 = vmatprep.subr.mxu0 0.0
    %653 = vmatpush1.msra.mxu0 0.0
    %654 = vmatprep.subr.mxu0 0.0
    %655 = vmatpush1.msra.mxu0 0.0
    %656 = vmatprep.subr.mxu0 0.0
    %657 = vmatpush1.msra.mxu0 0.0
    %658 = vmatprep.subr.mxu0 0.0
    %659 = vmatpush1.msra.mxu0 0.0
    %660 = vmatprep.subr.mxu0 0.0
    %661 = vmatpush1.msra.mxu0 0.0
    %662 = vmatprep.subr.mxu0 0.0
    %663 = vmatpush1.msra.mxu0 0.0
    %664 = vmatprep.subr.mxu0 0.0
    %665 = vmatpush1.msra.mxu0 0.0
    %666 = vmatprep.subr.mxu0 0.0
    %667 = vmatpush1.msra.mxu0 0.0
    %668 = vmatprep.subr.mxu0 0.0
    %669 = vmatpush1.msra.mxu0 0.0
    %670 = vmatprep.subr.mxu0 0.0
    %671 = vmatpush1.msra.mxu0 0.0
    %672 = vmatprep.subr.mxu0 0.0
    %673 = vmatpush1.msra.mxu0 0.0
    %674 = vmatprep.subr.mxu0 0.0
    %675 = vmatpush1.msra.mxu0 0.0
    %676 = vmatprep.subr.mxu0 0.0
    %677 = vmatpush1.msra.mxu0 0.0
    %678 = vmatprep.subr.mxu0 0.0
    %679 = vmatpush1.msra.mxu0 0.0
    %680 = vmatprep.subr.mxu0 0.0
    %681 = vmatpush1.msra.mxu0 0.0
    %682 = vmatprep.subr.mxu0 0.0
    %683 = vmatpush1.msra.mxu0 0.0
    %684 = vmatprep.subr.mxu0 0.0
    %685 = vmatpush1.msra.mxu0 0.0
    %686 = vmatprep.subr.mxu0 0.0
    %687 = vmatpush1.msra.mxu0 0.0
    %688 = vmatprep.subr.mxu0 0.0
    %689 = vmatpush1.msra.mxu0 0.0
    %690 = vmatprep.subr.mxu0 0.0
    %691 = vmatpush1.msra.mxu0 0.0
    %692 = vmatprep.subr.mxu0 0.0
    %693 = vmatpush1.msra.mxu0 0.0
    %694 = vmatprep.subr.mxu0 0.0
    %695 = vmatpush1.msra.mxu0 0.0
    %696 = vmatprep.subr.mxu0 0.0
    %697 = vmatpush1.msra.mxu0 0.0
    %698 = vmatprep.subr.mxu0 0.0
    %699 = vmatpush1.msra.mxu0 0.0
    %700 = vmatprep.subr.mxu0 0.0
    %701 = vmatpush1.msra.mxu0 0.0
    %702 = vmatprep.subr.mxu0 0.0
    %703 = vmatpush1.msra.mxu0 0.0
    %704 = vmatprep.subr.mxu0 0.0
    %705 = vmatpush1.msra.mxu0 0.0
    %706 = vmatprep.mubr.f32.mxu0 0.0
    %707 = vmatmul.mubr.f32.gmra.mrb[0].mxu0 %v640
    %v708 = vpop.f32.mrb[0].mxu0
    %v709 = vadd.f32 0.0, %v708
    %v710 = vpop.f32.mrb[0].mxu0
    %711 = vdwg.mxu0
    %712 = vmatprep.subr.mxu0 0.0
    %713 = vmatpush1.msra.mxu0 %v709
    %714 = vmatprep.subr.mxu0 0.0
    %715 = vmatpush1.msra.mxu0 0.0
    %716 = vmatprep.subr.mxu0 0.0
    %717 = vmatpush1.msra.mxu0 0.0
    %718 = vmatprep.subr.mxu0 0.0
    %719 = vmatpush1.msra.mxu0 0.0
    %720 = vmatprep.subr.mxu0 0.0
    %721 = vmatpush1.msra.mxu0 0.0
    %722 = vmatprep.subr.mxu0 0.0
    %723 = vmatpush1.msra.mxu0 0.0
    %724 = vmatprep.subr.mxu0 0.0
    %725 = vmatpush1.msra.mxu0 0.0
    %726 = vmatprep.subr.mxu0 0.0
    %727 = vmatpush1.msra.mxu0 0.0
    %728 = vmatprep.subr.mxu0 0.0
    %729 = vmatpush1.msra.mxu0 0.0
    %730 = vmatprep.subr.mxu0 0.0
    %731 = vmatpush1.msra.mxu0 0.0
    %732 = vmatprep.subr.mxu0 0.0
    %733 = vmatpush1.msra.mxu0 0.0
    %734 = vmatprep.subr.mxu0 0.0
    %735 = vmatpush1.msra.mxu0 0.0
    %736 = vmatprep.subr.mxu0 0.0
    %737 = vmatpush1.msra.mxu0 0.0
    %738 = vmatprep.subr.mxu0 0.0
    %739 = vmatpush1.msra.mxu0 0.0
    %740 = vmatprep.subr.mxu0 0.0
    %741 = vmatpush1.msra.mxu0 0.0
    %742 = vmatprep.subr.mxu0 0.0
    %743 = vmatpush1.msra.mxu0 0.0
    %744 = vmatprep.subr.mxu0 0.0
    %745 = vmatpush1.msra.mxu0 0.0
    %746 = vmatprep.subr.mxu0 0.0
    %747 = vmatpush1.msra.mxu0 0.0
    %748 = vmatprep.subr.mxu0 0.0
    %749 = vmatpush1.msra.mxu0 0.0
    %750 = vmatprep.subr.mxu0 0.0
    %751 = vmatpush1.msra.mxu0 0.0
    %752 = vmatprep.subr.mxu0 0.0
    %753 = vmatpush1.msra.mxu0 0.0
    %754 = vmatprep.subr.mxu0 0.0
    %755 = vmatpush1.msra.mxu0 0.0
    %756 = vmatprep.subr.mxu0 0.0
    %757 = vmatpush1.msra.mxu0 0.0
    %758 = vmatprep.subr.mxu0 0.0
    %759 = vmatpush1.msra.mxu0 0.0
    %760 = vmatprep.subr.mxu0 0.0
    %761 = vmatpush1.msra.mxu0 0.0
    %762 = vmatprep.subr.mxu0 0.0
    %763 = vmatpush1.msra.mxu0 0.0
    %764 = vmatprep.subr.mxu0 0.0
    %765 = vmatpush1.msra.mxu0 0.0
    %766 = vmatprep.subr.mxu0 0.0
    %767 = vmatpush1.msra.mxu0 0.0
    %768 = vmatprep.subr.mxu0 0.0
    %769 = vmatpush1.msra.mxu0 0.0
    %770 = vmatprep.subr.mxu0 0.0
    %771 = vmatpush1.msra.mxu0 0.0
    %772 = vmatprep.subr.mxu0 0.0
    %773 = vmatpush1.msra.mxu0 0.0
    %774 = vmatprep.subr.mxu0 0.0
    %775 = vmatpush1.msra.mxu0 0.0
    %776 = vmatprep.mubr.f32.mxu0 0.0
    %777 = vmatmul.mubr.f32.gmra.mrb[0].mxu0 %v407
    %v778 = vpop.f32.mrb[0].mxu0
    %v779 = vadd.f32 %v403, %v778
    %v780 = vpop.f32.mrb[0].mxu0
    %781 = vmatprep.mubr.f32.mxu0 0.0
    %782 = vmatmul.mubr.f32.gmra.mrb[0].mxu0 %v410
    %v783 = vpop.f32.mrb[0].mxu0
    %v784 = vadd.f32 %v403, %v783
    %v785 = vpop.f32.mrb[0].mxu0
    %786 = vdwg.mxu0
    %v787 = vmax.f32 %v779, 0.0
    %v788 = vmax.f32 %v784, 0.0
    %v789 = vadd.f32 %v491, %v787
    %v790 = vadd.f32 %v492, %v788
    %v791 = vmax.f32 %v789, 0.0
    %v792 = vmax.f32 %v790, 0.0
    %793 = vst.msk [vmem:[#allocation7] sm:$0xff] %vm249, %v791
    %794 = vst.msk [vmem:[#allocation7 + $0x8] sm:$0xff] %vm249, %v792
    %795 = vst.msk [vmem:[#allocation8] sm:$0xff] %vm249, %v638
    // Predicated region
    $region58: #{tpu_custom_call.1} parent=1 // pred_check
      _
    $region59: #{tpu_custom_call.1} parent=1 // pred_check_branch
      %797 = sbr.rel (0) target = $region61
    $region60: #{tpu_custom_call.1} parent=1 // pred_region
      %s799 = ssub.s32 256, 256
      %800 = vsyncadd [#allocation4], %s799
      %s801 = sshll.u32 [#allocation7], 4
      %s802 = int_to_ptr.vmem [resolvable:$true] %s801
      %807 = dma.vmem_to_hbm [thread:$0]  %s802, 256, %s12, [#allocation4], 128, 128, 8
    $region61: #{tpu_custom_call.1} parent=1 // pred_fallthru
      _
    // Predicated region
    $region62: #{tpu_custom_call.1} parent=1 // pred_check
      _
    $region63: #{tpu_custom_call.1} parent=1 // pred_check_branch
      %809 = sbr.rel (0) target = $region65
    $region64: #{tpu_custom_call.1} parent=1 // pred_region
      %s811 = ssub.s32 128, 128
      %812 = vsyncadd [#allocation9], %s811
      %s814 = sshll.u32 [#allocation8], 4
      %s815 = int_to_ptr.vmem [resolvable:$true] %s814
      %817 = dma.vmem_to_hbm [thread:$0]  %s815, 128, %s13, [#allocation9]
    $region65: #{tpu_custom_call.1} parent=1 // pred_fallthru
      _
    // Predicated region
    $region66: #{tpu_custom_call.1} parent=1 // pred_check
      _
    $region67: #{tpu_custom_call.1} parent=1 // pred_check_branch
      %819 = sbr.rel (0) target = $region69
    $region68: #{tpu_custom_call.1} parent=1 // pred_region
      %820 = dma.done [#allocation4], 256
    $region69: #{tpu_custom_call.1} parent=1 // pred_fallthru
      _
    // Predicated region
    $region70: #{tpu_custom_call.1} parent=1 // pred_check
      _
    $region71: #{tpu_custom_call.1} parent=1 // pred_check_branch
      %822 = sbr.rel (0) target = $region73
    $region72: #{tpu_custom_call.1} parent=1 // pred_region
      %823 = dma.done [#allocation9], 128
    $region73: #{tpu_custom_call.1} parent=1 // pred_fallthru
      _
    %824 = vsyncpa [#allocation3], 1
    %825 = vsyncpa [#allocation6], 1
    %826 = vsyncpa [#allocation4], 1
    %827 = vsyncpa [#allocation9], 1

</llo_original>
